<compile_context>
chip_gen: v7x
topology: tpu7x:2x2x1
jax: 0.10.0
libtpu: 0.0.40
codegen_flags: <defaults>
</compile_context>

<pallas_src>
import functools

import jax
import jax.numpy as jnp
from jax.experimental import pallas as pl
from jax.experimental.pallas import tpu as pltpu

BN_EPS = 1e-5
LANE = 128
SUB = 8            # sublane quantum
ROW_ALIGN = 16     # slab band alignment (bf16 packed-row granularity)
_SUBNET_ORDER = ('sig_vs_ewk', 'sig_vs_dy', 'no_mass', 'mass')


def _round_up(x, m):
    return ((x + m - 1) // m) * m


# -----------------------------------------------------------------------------
# Wrapper-side weight preparation (trace-time, pure JAX)
# -----------------------------------------------------------------------------
def _fold_bn(params, nlayers):
    """[w,b,gamma,beta,mean,var]*L + [w_out,b_out]  ->  [(W', b')] * (L+1)."""
    out = []
    idx = 0
    for _ in range(nlayers):
        w, b, gamma, beta, mean, var = params[idx:idx + 6]
        idx += 6
        scale = gamma * jax.lax.rsqrt(var + BN_EPS)           # (1, n)
        out.append((w * scale, (b - mean) * scale + beta))
    out.append((params[idx], params[idx + 1]))                # output head, no BN
    return out


def _block_diag(mats):
    rows = sum(m.shape[0] for m in mats)
    cols = sum(m.shape[1] for m in mats)
    out = jnp.zeros((rows, cols), jnp.float32)
    r = c = 0
    for m in mats:
        out = out.at[r:r + m.shape[0], c:c + m.shape[1]].set(m)
        r += m.shape[0]
        c += m.shape[1]
    return out


def _build_chain(sub_params, sub_nlayers, comb_params, comb_nlayers,
                 mass_dim, nomass_dim):
    """Fuse the 4 subnets + combination MLP into one layer chain.

    Returns (chain, d_all) where chain = [(W (n_in,n_out), b (1,n_out), act)].
    Stacking is exact: zeroed feature rows for 'no_mass'/'mass', block-diagonal
    deeper layers, the four (n,1) heads stacked into (4n, 4).
    """
    folded = {k: _fold_bn(sub_params[k], sub_nlayers) for k in _SUBNET_ORDER}
    d_all = mass_dim + nomass_dim
    chain = []

    # Layer 0: every net reads the shared (B, d_all) = cat(mass, nomass) input.
    ws, bs = [], []
    for name in _SUBNET_ORDER:
        w, b = folded[name][0]
        if name == 'no_mass':
            wf = jnp.zeros((d_all, w.shape[1]), jnp.float32).at[mass_dim:, :].set(w)
        elif name == 'mass':
            wf = jnp.zeros((d_all, w.shape[1]), jnp.float32).at[:mass_dim, :].set(w)
        else:
            wf = w
        ws.append(wf)
        bs.append(b)
    chain.append((jnp.concatenate(ws, 1), jnp.concatenate(bs, 1), 'tanh'))

    # Deeper subnet hidden layers: block-diagonal.
    for layer in range(1, sub_nlayers):
        ws = [folded[n][layer][0] for n in _SUBNET_ORDER]
        bs = [folded[n][layer][1] for n in _SUBNET_ORDER]
        chain.append((_block_diag(ws), jnp.concatenate(bs, 1), 'tanh'))

    # Four (n,1) output heads -> (4n, 4), sigmoid -> combine_input.
    ws = [folded[n][sub_nlayers][0] for n in _SUBNET_ORDER]
    bs = [folded[n][sub_nlayers][1] for n in _SUBNET_ORDER]
    chain.append((_block_diag(ws), jnp.concatenate(bs, 1), 'sigmoid'))

    # Combination MLP.
    comb = _fold_bn(comb_params, comb_nlayers)
    for li in range(comb_nlayers):
        w, b = comb[li]
        chain.append((w, b, 'tanh'))
    w, b = comb[-1]
    chain.append((w, b, 'sigmoid'))
    return chain, d_all


def _pack_slab(chain, d_in, dtype=jnp.bfloat16):
    """Transpose, zero-pad and stack all weights + bias columns in ONE slab.

    Each layer contributes a weight band Wt (n_out_pad, n_in_pad) and a bias
    column band (n_out_pad, 1), both at column 0 of a lane-dense slab whose
    width is the max padded fan-in (>= 128).  Bands start at 16-row-aligned
    offsets so bf16 slices stay packed-row aligned.  Zero padding is exact:
    padded output rows have zero weights/bias, and downstream weight columns
    for padded inputs are zero, so garbage (tanh(0)=0 / sigmoid(0)=0.5) never
    reaches a real output.

    Returns (slab, meta, d_in_pad) with meta = ((w_off, b_off, n_out_pad,
    n_in_pad, act), ...) — all static Python values.
    """
    d_in_pad = _round_up(d_in, SUB)
    n_in_pad = d_in_pad
    blocks, meta = [], []
    r = 0
    ncols = LANE
    for (w, b, act) in chain:
        n_in, n_out = w.shape
        n_out_pad = _round_up(n_out, SUB)
        wt = jnp.zeros((n_out_pad, n_in_pad), jnp.float32)
        wt = wt.at[:n_out, :n_in].set(w.T)
        bc = jnp.zeros((n_out_pad, 1), jnp.float32)
        bc = bc.at[:n_out, 0].set(b.reshape(-1))
        ncols = max(ncols, _round_up(n_in_pad, LANE))

        w_off = r
        blocks.append((w_off, wt))
        r += _round_up(n_out_pad, ROW_ALIGN)
        b_off = r
        blocks.append((b_off, bc))
        r += _round_up(n_out_pad, ROW_ALIGN)

        meta.append((w_off, b_off, n_out_pad, n_in_pad, act))
        n_in_pad = n_out_pad

    slab = jnp.zeros((_round_up(r, ROW_ALIGN), ncols), jnp.float32)
    for off, blk in blocks:
        slab = slab.at[off:off + blk.shape[0], :blk.shape[1]].set(blk)
    return slab.astype(dtype), tuple(meta), d_in_pad


def _choose_batch_tile(b, block_batch):
    """Lane-dense batch tile (multiple of 128), >= 2 grid steps when possible."""
    tb = min(_round_up(block_batch, LANE), _round_up(b, LANE))
    if b > LANE:                       # keep both v7x TensorCores busy
        tb = min(tb, _round_up(pl.cdiv(b, 2), LANE))
    return max(tb, LANE)


# -----------------------------------------------------------------------------
# Fused Pallas kernel: whole network for one batch tile (batch on lanes)
# -----------------------------------------------------------------------------
def _fused_kernel(x_ref, slab_ref, out_ref, *, meta):
    a = x_ref[...]                                  # (d_in_pad, TB) bf16
    last = len(meta) - 1
    for idx, (w_off, b_off, n_out, n_in, act) in enumerate(meta):
        w = slab_ref[w_off:w_off + n_out, 0:n_in]           # bf16, static slice
        b = slab_ref[b_off:b_off + n_out, 0:1].astype(jnp.float32)
        z = jnp.dot(w, a, preferred_element_type=jnp.float32) + b   # MXU, f32 acc
        if act == 'tanh':
            z = jnp.tanh(z)
        else:
            # logistic via one EUP tanh push: sigmoid(x) = 0.5*(1 + tanh(x/2))
            z = 0.5 * (1.0 + jnp.tanh(0.5 * z))
        a = z if idx == last else z.astype(jnp.bfloat16)     # bf16 only at dot inputs
    out_ref[...] = a[0:1, :]                                 # lane-dense (1, TB) row


# -----------------------------------------------------------------------------
# NetPisaRun2Combination forward (one pallas_call for the whole model)
# -----------------------------------------------------------------------------
def net_pisa_run2_combination_forward(inp_nomass, inp_mass, sub_params, comb_params,
                                      *, sub_nlayers, comb_nlayers,
                                      block_batch=2048):
    mass_dim = inp_mass.shape[1]
    nomass_dim = inp_nomass.shape[1]
    b = inp_mass.shape[0]

    chain, d_all = _build_chain(sub_params, sub_nlayers, comb_params,
                                comb_nlayers, mass_dim, nomass_dim)
    slab, meta, d_in_pad = _pack_slab(chain, d_all, dtype=jnp.bfloat16)

    # Input, transposed to (features, batch): torch.cat((inp_mass, inp_nomass), 1).T
    xt = jnp.concatenate([inp_mass, inp_nomass], axis=1).T.astype(jnp.bfloat16)

    tb = _choose_batch_tile(b, block_batch)
    bp = _round_up(b, tb)
    xt = jnp.pad(xt, ((0, d_in_pad - d_all), (0, bp - b)))

    # Advisory cost estimate for XLA scheduling.
    flops = sum(2 * n_out * n_in * bp for (_, _, n_out, n_in, _) in meta)
    trans = sum(n_out for (_, _, n_out, _, _) in meta) * bp
    bytes_accessed = 2 * xt.size + 2 * slab.size + 4 * bp

    kernel = functools.partial(_fused_kernel, meta=meta)
    out = pl.pallas_call(
        kernel,
        out_shape=jax.ShapeDtypeStruct((1, bp), jnp.float32),
        grid=(bp // tb,),
        in_specs=[
            pl.BlockSpec((d_in_pad, tb), lambda i: (0, i)),   # batch-tiled input
            pl.BlockSpec(slab.shape, lambda i: (0, 0)),       # resident param slab
        ],
        out_specs=pl.BlockSpec((1, tb), lambda i: (0, i)),    # lane-dense output row
        compiler_params=pltpu.CompilerParams(
            dimension_semantics=("parallel",)),
        cost_estimate=pl.CostEstimate(flops=int(flops),
                                      transcendentals=int(trans),
                                      bytes_accessed=int(bytes_accessed)),
    )(xt, slab)
    return out[0, :b].reshape(b, 1)


# -----------------------------------------------------------------------------
# Deterministic synthetic parameter construction
# -----------------------------------------------------------------------------
def make_mlp_params(key, in_dim, nnodes):
    """Build [w,b,gamma,beta,mean,var]*nlayers + [w_out,b_out] (all float32)."""
    params = []
    d = in_dim
    for n in nnodes:
        key, kw, kb, km, kv = jax.random.split(key, 5)
        w = jax.random.normal(kw, (d, n), jnp.float32) / jnp.sqrt(float(d))
        b = 0.01 * jax.random.normal(kb, (1, n), jnp.float32)
        gamma = jnp.ones((1, n), jnp.float32)
        beta = jnp.zeros((1, n), jnp.float32)
        mean = 0.1 * jax.random.normal(km, (1, n), jnp.float32)
        var = 1.0 + 0.1 * jax.random.uniform(kv, (1, n), jnp.float32)
        params += [w, b, gamma, beta, mean, var]
        d = n
    key, kw, kb = jax.random.split(key, 3)
    w_out = jax.random.normal(kw, (d, 1), jnp.float32) / jnp.sqrt(float(d))
    b_out = 0.01 * jax.random.normal(kb, (1, 1), jnp.float32)
    params += [w_out, b_out]
    return params


# -----------------------------------------------------------------------------
# Pure-JAX f32 reference (sanity check only)
# -----------------------------------------------------------------------------
def _mlp_ref(x, params, nlayers):
    idx = 0
    for _ in range(nlayers):
        w, b, gamma, beta, mean, var = params[idx:idx + 6]
        idx += 6
        z = x @ w + b
        z = (z - mean) * (gamma / jnp.sqrt(var + BN_EPS)) + beta
        x = jnp.tanh(z)
    w_out, b_out = params[idx], params[idx + 1]
    return jax.nn.sigmoid(x @ w_out + b_out)


def _ref_forward(inp_nomass, inp_mass, sub_params, sub_nlayers,
                 comb_params, comb_nlayers):
    all_inputs = jnp.concatenate([inp_mass, inp_nomass], axis=1)
    o1 = _mlp_ref(all_inputs, sub_params['sig_vs_ewk'], sub_nlayers)
    o2 = _mlp_ref(all_inputs, sub_params['sig_vs_dy'], sub_nlayers)
    o3 = _mlp_ref(inp_nomass, sub_params['no_mass'], sub_nlayers)
    o4 = _mlp_ref(inp_mass, sub_params['mass'], sub_nlayers)
    comb = jnp.concatenate([o1, o2, o3, o4], axis=1)
    return _mlp_ref(comb, comb_params, comb_nlayers)


if __name__ == "__main__":
    # Small deterministic example: ragged batch exercises batch padding and a
    # 2-step grid (both v7x TensorCores active under "parallel" semantics).
    batch = 300
    nomass_dim = 12
    mass_dim = 4
    all_dim = nomass_dim + mass_dim

    sub_nlayers = 2
    sub_nnodes = [32, 32]            # stacked -> 128-wide blocks
    comb_nlayers = 2
    comb_nnodes = [16, 16]           # combination MLP; input dim fixed at 4

    key = jax.random.PRNGKey(0)
    key, k_nm, k_m, k1, k2, k3, k4, k5 = jax.random.split(key, 8)

    inp_nomass = jax.random.normal(k_nm, (batch, nomass_dim), jnp.float32)
    inp_mass = jax.random.normal(k_m, (batch, mass_dim), jnp.float32)

    sub_params = {
        'sig_vs_ewk': make_mlp_params(k1, all_dim, sub_nnodes),
        'sig_vs_dy': make_mlp_params(k2, all_dim, sub_nnodes),
        'no_mass': make_mlp_params(k3, nomass_dim, sub_nnodes),
        'mass': make_mlp_params(k4, mass_dim, sub_nnodes),
    }
    comb_params = make_mlp_params(k5, 4, comb_nnodes)

    fwd = jax.jit(functools.partial(net_pisa_run2_combination_forward,
                                    sub_nlayers=sub_nlayers,
                                    comb_nlayers=comb_nlayers))
    out = jax.block_until_ready(fwd(inp_nomass, inp_mass, sub_params, comb_params))

    ref = _ref_forward(inp_nomass, inp_mass, sub_params, sub_nlayers,
                       comb_params, comb_nlayers)
    assert out.shape == (batch, 1)
    # bf16 MXU path vs. f32 reference: loose-but-meaningful tolerance on the
    # sigmoid output in [0, 1] (observed deviations are ~1e-3 level).
    assert jnp.allclose(out, ref, atol=5e-2), float(jnp.max(jnp.abs(out - ref)))

    print("KERNEL_OK")
</pallas_src>

<mosaic_0001>
module attributes {stable_mosaic.version = 11 : i64} {
  func.func @_fused_kernel(%arg0: i32, %arg1: memref<16x256xbf16, #tpu.memory_space<vmem>>, %arg2: memref<640x128xbf16, #tpu.memory_space<vmem>>, %arg3: memref<1x256xf32, #tpu.memory_space<vmem>>) attributes {dimension_semantics = [#tpu.dimension_semantics<parallel>], iteration_bounds = array<i64: 2>, scalar_prefetch = 0 : i64, scratch_operands = 0 : i64, tpu.core_type = #tpu.core_type<tc>, window_params = [{transform_indices = @transform_0, window_bounds = array<i64: 16, 256>}, {pipeline_mode = #tpu.pipeline_mode<synchronous>, transform_indices = @transform_1, window_bounds = array<i64: 640, 128>}, {transform_indices = @transform_2, window_bounds = array<i64: 1, 256>}]} {
    %c0 = arith.constant 0 : index
    %c0_0 = arith.constant 0 : index
    %0 = vector.load %arg1[%c0, %c0_0] : memref<16x256xbf16, #tpu.memory_space<vmem>>, vector<16x256xbf16>
    %c0_1 = arith.constant 0 : index
    %c0_2 = arith.constant 0 : index
    %1 = vector.load %arg2[%c0_1, %c0_2] : memref<640x128xbf16, #tpu.memory_space<vmem>>, vector<128x16xbf16>
    %c128 = arith.constant 128 : index
    %c0_3 = arith.constant 0 : index
    %2 = vector.load %arg2[%c128, %c0_3] : memref<640x128xbf16, #tpu.memory_space<vmem>>, vector<128x1xbf16>
    %3 = arith.extf %2 : vector<128x1xbf16> to vector<128x1xf32>
    %cst = arith.constant dense<0.000000e+00> : vector<128x256xf32>
    %4 = tpu.matmul %1, %0, %cst {dimension_numbers = #tpu.dot_dimension_numbers<[1], [0], [0], [1], [0, 0, 1, 1], [], []>} : vector<128x16xbf16>, vector<16x256xbf16>, vector<128x256xf32> -> vector<128x256xf32>
    %5 = vector.broadcast %3 : vector<128x1xf32> to vector<128x256xf32>
    %6 = arith.addf %4, %5 : vector<128x256xf32>
    %7 = math.tanh %6 : vector<128x256xf32>
    %8 = arith.truncf %7 : vector<128x256xf32> to vector<128x256xbf16>
    %c256 = arith.constant 256 : index
    %c0_4 = arith.constant 0 : index
    %9 = vector.load %arg2[%c256, %c0_4] : memref<640x128xbf16, #tpu.memory_space<vmem>>, vector<128x128xbf16>
    %c384 = arith.constant 384 : index
    %c0_5 = arith.constant 0 : index
    %10 = vector.load %arg2[%c384, %c0_5] : memref<640x128xbf16, #tpu.memory_space<vmem>>, vector<128x1xbf16>
    %11 = arith.extf %10 : vector<128x1xbf16> to vector<128x1xf32>
    %cst_6 = arith.constant dense<0.000000e+00> : vector<128x256xf32>
    %12 = tpu.matmul %9, %8, %cst_6 {dimension_numbers = #tpu.dot_dimension_numbers<[1], [0], [0], [1], [0, 0, 1, 1], [], []>} : vector<128x128xbf16>, vector<128x256xbf16>, vector<128x256xf32> -> vector<128x256xf32>
    %13 = vector.broadcast %11 : vector<128x1xf32> to vector<128x256xf32>
    %14 = arith.addf %12, %13 : vector<128x256xf32>
    %15 = math.tanh %14 : vector<128x256xf32>
    %16 = arith.truncf %15 : vector<128x256xf32> to vector<128x256xbf16>
    %c512 = arith.constant 512 : index
    %c0_7 = arith.constant 0 : index
    %17 = vector.load %arg2[%c512, %c0_7] : memref<640x128xbf16, #tpu.memory_space<vmem>>, vector<8x128xbf16>
    %c528 = arith.constant 528 : index
    %c0_8 = arith.constant 0 : index
    %18 = vector.load %arg2[%c528, %c0_8] : memref<640x128xbf16, #tpu.memory_space<vmem>>, vector<8x1xbf16>
    %19 = arith.extf %18 : vector<8x1xbf16> to vector<8x1xf32>
    %cst_9 = arith.constant dense<0.000000e+00> : vector<8x256xf32>
    %20 = tpu.matmul %17, %16, %cst_9 {dimension_numbers = #tpu.dot_dimension_numbers<[1], [0], [0], [1], [0, 0, 1, 1], [], []>} : vector<8x128xbf16>, vector<128x256xbf16>, vector<8x256xf32> -> vector<8x256xf32>
    %21 = vector.broadcast %19 : vector<8x1xf32> to vector<8x256xf32>
    %22 = arith.addf %20, %21 : vector<8x256xf32>
    %cst_10 = arith.constant 5.000000e-01 : f32
    %23 = vector.broadcast %cst_10 : f32 to vector<8x256xf32>
    %24 = arith.mulf %23, %22 : vector<8x256xf32>
    %25 = math.tanh %24 : vector<8x256xf32>
    %cst_11 = arith.constant 1.000000e+00 : f32
    %26 = vector.broadcast %cst_11 : f32 to vector<8x256xf32>
    %27 = arith.addf %26, %25 : vector<8x256xf32>
    %cst_12 = arith.constant 5.000000e-01 : f32
    %28 = vector.broadcast %cst_12 : f32 to vector<8x256xf32>
    %29 = arith.mulf %28, %27 : vector<8x256xf32>
    %30 = arith.truncf %29 : vector<8x256xf32> to vector<8x256xbf16>
    %c544 = arith.constant 544 : index
    %c0_13 = arith.constant 0 : index
    %31 = vector.load %arg2[%c544, %c0_13] : memref<640x128xbf16, #tpu.memory_space<vmem>>, vector<16x8xbf16>
    %c560 = arith.constant 560 : index
    %c0_14 = arith.constant 0 : index
    %32 = vector.load %arg2[%c560, %c0_14] : memref<640x128xbf16, #tpu.memory_space<vmem>>, vector<16x1xbf16>
    %33 = arith.extf %32 : vector<16x1xbf16> to vector<16x1xf32>
    %cst_15 = arith.constant dense<0.000000e+00> : vector<16x256xf32>
    %34 = tpu.matmul %31, %30, %cst_15 {dimension_numbers = #tpu.dot_dimension_numbers<[1], [0], [0], [1], [0, 0, 1, 1], [], []>} : vector<16x8xbf16>, vector<8x256xbf16>, vector<16x256xf32> -> vector<16x256xf32>
    %35 = vector.broadcast %33 : vector<16x1xf32> to vector<16x256xf32>
    %36 = arith.addf %34, %35 : vector<16x256xf32>
    %37 = math.tanh %36 : vector<16x256xf32>
    %38 = arith.truncf %37 : vector<16x256xf32> to vector<16x256xbf16>
    %c576 = arith.constant 576 : index
    %c0_16 = arith.constant 0 : index
    %39 = vector.load %arg2[%c576, %c0_16] : memref<640x128xbf16, #tpu.memory_space<vmem>>, vector<16x16xbf16>
    %c592 = arith.constant 592 : index
    %c0_17 = arith.constant 0 : index
    %40 = vector.load %arg2[%c592, %c0_17] : memref<640x128xbf16, #tpu.memory_space<vmem>>, vector<16x1xbf16>
    %41 = arith.extf %40 : vector<16x1xbf16> to vector<16x1xf32>
    %cst_18 = arith.constant dense<0.000000e+00> : vector<16x256xf32>
    %42 = tpu.matmul %39, %38, %cst_18 {dimension_numbers = #tpu.dot_dimension_numbers<[1], [0], [0], [1], [0, 0, 1, 1], [], []>} : vector<16x16xbf16>, vector<16x256xbf16>, vector<16x256xf32> -> vector<16x256xf32>
    %43 = vector.broadcast %41 : vector<16x1xf32> to vector<16x256xf32>
    %44 = arith.addf %42, %43 : vector<16x256xf32>
    %45 = math.tanh %44 : vector<16x256xf32>
    %46 = arith.truncf %45 : vector<16x256xf32> to vector<16x256xbf16>
    %c608 = arith.constant 608 : index
    %c0_19 = arith.constant 0 : index
    %47 = vector.load %arg2[%c608, %c0_19] : memref<640x128xbf16, #tpu.memory_space<vmem>>, vector<8x16xbf16>
    %c624 = arith.constant 624 : index
    %c0_20 = arith.constant 0 : index
    %48 = vector.load %arg2[%c624, %c0_20] : memref<640x128xbf16, #tpu.memory_space<vmem>>, vector<8x1xbf16>
    %49 = arith.extf %48 : vector<8x1xbf16> to vector<8x1xf32>
    %cst_21 = arith.constant dense<0.000000e+00> : vector<8x256xf32>
    %50 = tpu.matmul %47, %46, %cst_21 {dimension_numbers = #tpu.dot_dimension_numbers<[1], [0], [0], [1], [0, 0, 1, 1], [], []>} : vector<8x16xbf16>, vector<16x256xbf16>, vector<8x256xf32> -> vector<8x256xf32>
    %51 = vector.broadcast %49 : vector<8x1xf32> to vector<8x256xf32>
    %52 = arith.addf %50, %51 : vector<8x256xf32>
    %cst_22 = arith.constant 5.000000e-01 : f32
    %53 = vector.broadcast %cst_22 : f32 to vector<8x256xf32>
    %54 = arith.mulf %53, %52 : vector<8x256xf32>
    %55 = math.tanh %54 : vector<8x256xf32>
    %cst_23 = arith.constant 1.000000e+00 : f32
    %56 = vector.broadcast %cst_23 : f32 to vector<8x256xf32>
    %57 = arith.addf %56, %55 : vector<8x256xf32>
    %cst_24 = arith.constant 5.000000e-01 : f32
    %58 = vector.broadcast %cst_24 : f32 to vector<8x256xf32>
    %59 = arith.mulf %58, %57 : vector<8x256xf32>
    %60 = vector.extract_strided_slice %59 {offsets = [0, 0], sizes = [1, 256], strides = [1, 1]} : vector<8x256xf32> to vector<1x256xf32>
    %c0_25 = arith.constant 0 : index
    %c0_26 = arith.constant 0 : index
    %61 = vector.load %arg3[%c0_25, %c0_26] : memref<1x256xf32, #tpu.memory_space<vmem>>, vector<1x256xf32>
    tpu.vector_store %arg3[%c0_25, %c0_26], %60 {strides = array<i32>} : memref<1x256xf32, #tpu.memory_space<vmem>>, vector<1x256xf32>,
    return
  }
  func.func @transform_0(%arg0: i32) -> (i32, i32) {
    %c0_i32 = arith.constant 0 : i32
    %c0_i32_0 = arith.constant 0 : i32
    return %c0_i32, %arg0 : i32, i32
  }
  func.func @transform_1(%arg0: i32) -> (i32, i32) {
    %c0_i32 = arith.constant 0 : i32
    %c0_i32_0 = arith.constant 0 : i32
    %c0_i32_1 = arith.constant 0 : i32
    return %c0_i32, %c0_i32_0 : i32, i32
  }
  func.func @transform_2(%arg0: i32) -> (i32, i32) {
    %c0_i32 = arith.constant 0 : i32
    %c0_i32_0 = arith.constant 0 : i32
    return %c0_i32, %arg0 : i32, i32
  }
}

</mosaic_0001>

<llo_original>
// kernel: net_pisa_run2_combination_forward.1
$region0: #{net_pisa_run2_combination_forward.1}
  #allocation0 [shape = 'u32[]', space=smem, size = 0x4, offset = 0x4, fixed_abs, tag = 'smem constant byte address 0x4 - core index']
  #allocation1 [shape = 'u32[144,128]{1,0:T(1,128)}', space=vmem, size = 0x12000, scoped, tag = 'internal scratch']
  %s0 = inlined_call_operand.vmem [shape: bf16[16,512], index: 0, kind: input, shape index: {}]
  %s1 = inlined_call_operand.vmem [shape: bf16[640,128], index: 1, kind: input, shape index: {}]
  %s2 = inlined_call_operand.vmem [shape: f32[1,512], index: 2, kind: output, shape index: {}]
  %s3 = sld [smem:[#allocation0]]
  $region79: #{net_pisa_run2_combination_forward.1} parent=0
    _
  %s5 = ssub.s32 1, %s3
  %s6 = scalar_select 0, %s5, %s3
  $region1: #{net_pisa_run2_combination_forward.1} parent=0
    #allocation2 [shape = 'u8[16384]{0}', space=vmem, size = 0x4000, scoped, tag = 'input window, operand 0']
    loop: start=0, step=1, limit=4
    $region2: #{net_pisa_run2_combination_forward.1} parent=1 // loop_pre_header
      _
    $region3: #{net_pisa_run2_combination_forward.1} parent=1 // loop_header
      %s8 = sphi 0, %s12
      %p9 = scmp.ge.s32.totalorder %s8, 4
      %s18 = sphi 0, %s20
      %s21 = sphi 0, %s18
      %s22 = sphi 0, %s21
      %s38 = sphi 0, %s22
      %s42 = sphi 0, %s42
      %s44 = sphi 0, %s42
      %s45 = sphi 0, %s44
      %s59 = sphi 0, %s45
      %s65 = sphi 0, %s67
      %s68 = sphi 0, %s65
      %s69 = sphi 0, %s68
      %s85 = sphi 0, %s69
    $region4: #{net_pisa_run2_combination_forward.1} parent=1 // loop_header_branch
      %11 = sbr.rel (%p9) target = $region8
    $region5: #{net_pisa_run2_combination_forward.1} parent=1 // loop_body
      %s13 = ssub.s32 %s8, 1
      %s14 = ssub.s32 %s8, 2
      %s15 = sadd.s32 %s8, 1
      %s16 = ssub.s32 %s8, %s15
      %p17 = scmp.eq.s32.totalorder %s16, 0
      %s19 = sadd.s32 %s18, 1
      %s20 = scalar_select %p17, %s18, %s19
      %p23 = pneg %p17
      %p24 = scmp.eq.s32.totalorder %s8, 1
      %p25 = por %p23, %p24
      %p26 = scmp.ne.s32.totalorder %s18, %s21
      %p27 = scmp.eq.s32.totalorder %s8, 0
      %p28 = por %p26, %p27
      %p29 = scmp.ne.s32.totalorder %s18, %s21
      %p30 = scmp.eq.s32.totalorder %s13, 1
      %p31 = por %p29, %p30
      %p32 = scmp.ne.s32.totalorder %s21, %s22
      %p33 = scmp.eq.s32.totalorder %s13, 0
      %p34 = por %p32, %p33
      %p35 = scmp.ne.s32.totalorder %s21, %s22
      %p36 = scmp.eq.s32.totalorder %s14, 1
      %p37 = por %p35, %p36
      %p39 = scmp.ne.s32.totalorder %s22, %s38
      %p40 = scmp.eq.s32.totalorder %s14, 0
      %p41 = por %p39, %p40
      %s43 = sadd.s32 %s42, 1
      %p46 = scmp.eq.s32.totalorder %s8, 1
      %p47 = scmp.ne.s32.totalorder %s42, %s44
      %p48 = scmp.eq.s32.totalorder %s8, 0
      %p49 = por %p47, %p48
      %p50 = scmp.ne.s32.totalorder %s42, %s44
      %p51 = scmp.eq.s32.totalorder %s13, 1
      %p52 = por %p50, %p51
      %p53 = scmp.ne.s32.totalorder %s44, %s45
      %p54 = scmp.eq.s32.totalorder %s13, 0
      %p55 = por %p53, %p54
      %p56 = scmp.ne.s32.totalorder %s44, %s45
      %p57 = scmp.eq.s32.totalorder %s14, 1
      %p58 = por %p56, %p57
      %p60 = scmp.ne.s32.totalorder %s45, %s59
      %p61 = scmp.eq.s32.totalorder %s14, 0
      %p62 = por %p60, %p61
      %s63 = ssub.s32 %s8, %s15
      %p64 = scmp.eq.s32.totalorder %s63, 0
      %s66 = sadd.s32 %s65, 1
      %s67 = scalar_select %p64, %s65, %s66
      %p70 = pneg %p64
      %p71 = scmp.eq.s32.totalorder %s8, 1
      %p72 = por %p70, %p71
      %p73 = scmp.ne.s32.totalorder %s65, %s68
      %p74 = scmp.eq.s32.totalorder %s8, 0
      %p75 = por %p73, %p74
      %p76 = scmp.ne.s32.totalorder %s65, %s68
      %p77 = scmp.eq.s32.totalorder %s13, 1
      %p78 = por %p76, %p77
      %p79 = scmp.ne.s32.totalorder %s68, %s69
      %p80 = scmp.eq.s32.totalorder %s13, 0
      %p81 = por %p79, %p80
      %p82 = scmp.ne.s32.totalorder %s68, %s69
      %p83 = scmp.eq.s32.totalorder %s14, 1
      %p84 = por %p82, %p83
      %p86 = scmp.ne.s32.totalorder %s69, %s85
      %p87 = scmp.eq.s32.totalorder %s14, 0
      %p88 = por %p86, %p87
      %p89 = scmp.le.s32.totalorder 1, %s8
      %p90 = scmp.lt.s32.totalorder %s8, 3
      %p91 = pnand %p89, %p90
      %p92 = pneg %p91
      // Predicated region
      $region9: #{net_pisa_run2_combination_forward.1} parent=5 // pred_check
        _
      $region10: #{net_pisa_run2_combination_forward.1} parent=5 // pred_check_branch
        %94 = sbr.rel (%p91) target = $region12
      $region11: #{net_pisa_run2_combination_forward.1} parent=5 // pred_region
        %s95 = ssub.s32 %s8, 1
        // Predicated region
        $region13: #{net_pisa_run2_combination_forward.1} parent=11 // pred_check
          %p96 = pneg %p55
        $region14: #{net_pisa_run2_combination_forward.1} parent=11 // pred_check_branch
          %98 = sbr.rel (%p96) target = $region16
        $region15: #{net_pisa_run2_combination_forward.1} parent=11 // pred_region
          _
        $region16: #{net_pisa_run2_combination_forward.1} parent=11 // pred_fallthru
          _
      $region12: #{net_pisa_run2_combination_forward.1} parent=5 // pred_fallthru
        _
      %p99 = scmp.lt.s32.totalorder %s8, 2
      // Predicated region
      $region17: #{net_pisa_run2_combination_forward.1} parent=5 // pred_check
        %p100 = pneg %p99
      $region18: #{net_pisa_run2_combination_forward.1} parent=5 // pred_check_branch
        %102 = sbr.rel (%p100) target = $region20
      $region19: #{net_pisa_run2_combination_forward.1} parent=5 // pred_region
        // Predicated region
        $region21: #{net_pisa_run2_combination_forward.1} parent=19 // pred_check
          %p103 = pneg %p28
        $region22: #{net_pisa_run2_combination_forward.1} parent=19 // pred_check_branch
          %105 = sbr.rel (%p103) target = $region24
        $region23: #{net_pisa_run2_combination_forward.1} parent=19 // pred_region
          %s106 = sand.u32 %s18, 1
          %s107 = sand.u32 %s18, 1
          %s108 = smul.addr %s107, 16
          %s109 = scalar_lea.vmem [#allocation2], %s108
          %s110 = smul.u32 2, %s8
          %s111 = smul.addr %s110, 4
          %s112 = scalar_lea.vmem %s0, %s111
          // Predicated region
          $region25: #{net_pisa_run2_combination_forward.1} parent=23 // pred_check
            _
          $region26: #{net_pisa_run2_combination_forward.1} parent=23 // pred_check_branch
            %114 = sbr.rel (0) target = $region28
          $region27: #{net_pisa_run2_combination_forward.1} parent=23 // pred_region
            // Predicated region
            $region29: #{net_pisa_run2_combination_forward.1} parent=27 // pred_check
              _
            $region30: #{net_pisa_run2_combination_forward.1} parent=27 // pred_check_branch
              %116 = sbr.rel (0) target = $region32
            $region31: #{net_pisa_run2_combination_forward.1} parent=27 // pred_region
              // Predicated region
              $region44: #{net_pisa_run2_combination_forward.1} parent=31 // pred_check
                _
              $region45: #{net_pisa_run2_combination_forward.1} parent=31 // pred_check_branch
                %133 = sbr.rel (0) target = $region47
              $region46: #{net_pisa_run2_combination_forward.1} parent=31 // pred_region
                loop: start=0, step=1, limit=1
                $region48: #{net_pisa_run2_combination_forward.1} parent=46 // loop_pre_header
                  _
                $region49: #{net_pisa_run2_combination_forward.1} parent=46 // loop_header
                  %s135 = sphi 0, %s139
                  %p136 = scmp.ge.s32.totalorder %s135, 1
                  %s140 = sphi %s112, %s112
                  %s141 = sphi %s109, %s109
                $region50: #{net_pisa_run2_combination_forward.1} parent=46 // loop_header_branch
                  %138 = sbr.rel (%p136) target = $region54
                $region51: #{net_pisa_run2_combination_forward.1} parent=46 // loop_body
                  %v142 = vld [vmem:[%s140] sm:$0xff]
                  %143 = vst [vmem:[%s141] sm:$0xff] %v142
                  %v144 = vld [vmem:[%s140 + $0x10] sm:$0xff]
                  %145 = vst [vmem:[%s141 + $0x8] sm:$0xff] %v144
                $region52: #{net_pisa_run2_combination_forward.1} parent=46 // loop_footer
                  %s139 = sadd.s32 1, %s135
                $region53: #{net_pisa_run2_combination_forward.1} parent=46 // loop_footer_branch
                  %134 = sbr.rel target = $region49
                $region54: #{net_pisa_run2_combination_forward.1} parent=46 // loop_exit
                  _
              $region47: #{net_pisa_run2_combination_forward.1} parent=31 // pred_fallthru
                _
              // Predicated region
              $region55: #{net_pisa_run2_combination_forward.1} parent=31 // pred_check
                _
              $region56: #{net_pisa_run2_combination_forward.1} parent=31 // pred_check_branch
                %147 = sbr.rel target = $region58
              $region57: #{net_pisa_run2_combination_forward.1} parent=31 // pred_region
                _
              $region58: #{net_pisa_run2_combination_forward.1} parent=31 // pred_fallthru
                _
            $region32: #{net_pisa_run2_combination_forward.1} parent=27 // pred_fallthru
              _
            // Predicated region
            $region33: #{net_pisa_run2_combination_forward.1} parent=27 // pred_check
              _
            $region34: #{net_pisa_run2_combination_forward.1} parent=27 // pred_check_branch
              %118 = sbr.rel target = $region36
            $region35: #{net_pisa_run2_combination_forward.1} parent=27 // pred_region
              loop: start=0, step=1, limit=1
              $region37: #{net_pisa_run2_combination_forward.1} parent=35 // loop_pre_header
                _
              $region38: #{net_pisa_run2_combination_forward.1} parent=35 // loop_header
                %s121 = sphi 0, %s125
                %p122 = scmp.ge.s32.totalorder %s121, 1
                %s126 = sphi %s112, %s112
                %s127 = sphi %s109, %s109
              $region39: #{net_pisa_run2_combination_forward.1} parent=35 // loop_header_branch
                %124 = sbr.rel (%p122) target = $region43
              $region40: #{net_pisa_run2_combination_forward.1} parent=35 // loop_body
                %v128 = vld [vmem:[%s126] sm:$0xff]
                %129 = vst [vmem:[%s127] sm:$0xff] %v128
                %v130 = vld [vmem:[%s126 + $0x10] sm:$0xff]
                %131 = vst [vmem:[%s127 + $0x8] sm:$0xff] %v130
              $region41: #{net_pisa_run2_combination_forward.1} parent=35 // loop_footer
                %s125 = sadd.s32 1, %s121
              $region42: #{net_pisa_run2_combination_forward.1} parent=35 // loop_footer_branch
                %120 = sbr.rel target = $region38
              $region43: #{net_pisa_run2_combination_forward.1} parent=35 // loop_exit
                _
            $region36: #{net_pisa_run2_combination_forward.1} parent=27 // pred_fallthru
              _
          $region28: #{net_pisa_run2_combination_forward.1} parent=23 // pred_fallthru
            _
          %148 = vnop
        $region24: #{net_pisa_run2_combination_forward.1} parent=19 // pred_fallthru
          _
      $region20: #{net_pisa_run2_combination_forward.1} parent=5 // pred_fallthru
        _
      %p149 = scmp.le.s32.totalorder 1, %s8
      %p150 = scmp.lt.s32.totalorder %s8, 3
      %p151 = pnand %p149, %p150
      %p152 = pneg %p151
      // Predicated region
      $region59: #{net_pisa_run2_combination_forward.1} parent=5 // pred_check
        _
      $region60: #{net_pisa_run2_combination_forward.1} parent=5 // pred_check_branch
        %154 = sbr.rel (%p151) target = $region62
      $region61: #{net_pisa_run2_combination_forward.1} parent=5 // pred_region
        %s155 = ssub.s32 %s8, 1
        %s156 = sand.u32 %s21, 1
        %s157 = sand.u32 %s21, 1
        %s158 = smul.addr %s157, 16
        %s159 = scalar_lea.vmem [#allocation2], %s158
        // Predicated region
        $region63: #{net_pisa_run2_combination_forward.1} parent=61 // pred_check
          %p160 = pneg %p34
        $region64: #{net_pisa_run2_combination_forward.1} parent=61 // pred_check_branch
          %162 = sbr.rel (%p160) target = $region66
        $region65: #{net_pisa_run2_combination_forward.1} parent=61 // pred_region
          _
        $region66: #{net_pisa_run2_combination_forward.1} parent=61 // pred_fallthru
          _
        %s163 = sand.u32 %s21, 1
        %s164 = sand.u32 %s21, 1
        %s165 = smul.addr %s164, 16
        %s166 = scalar_lea.vmem [#allocation2], %s165
        %p167 = pneg %p34
        %p168 = pneg %p31
        %p169 = pneg %p55
        %p170 = pneg %p52
        %p171 = pneg %p81
        %p172 = pneg %p78
        %s173 = smul.u32 2, %s13
        %p174 = scmp.lt.s32.totalorder %s173, 3
        %s175 = scalar_select %p174, %s173, 3
        %s176 = scalar_lea.vmem %s2, %s175
        %s177 = smul.u32 2, %s13
        %s178 = smul.u32 2, %s13
        %p179 = scmp.lt.s32.totalorder %s178, 3
        %s180 = scalar_select %p179, %s178, 3
        %s181 = scalar_lea.vmem %s2, %s180
        %s182 = smul.u32 2, %s13
        %v184 = vld [vmem:[%s159] sm:$0xff]
        %v185 = vld [vmem:[%s159 + $0x8] sm:$0xff]
        %v186 = vld [vmem:[%s1] sm:$0xf]
        %v187 = vld [vmem:[%s1 + $0x4] sm:$0xf]
        %v188 = vld [vmem:[%s1 + $0x8] sm:$0xf]
        %v189 = vld [vmem:[%s1 + $0xc] sm:$0xf]
        %v190 = vld [vmem:[%s1 + $0x10] sm:$0xf]
        %v191 = vld [vmem:[%s1 + $0x14] sm:$0xf]
        %v192 = vld [vmem:[%s1 + $0x18] sm:$0xf]
        %v193 = vld [vmem:[%s1 + $0x1c] sm:$0xf]
        %v194 = vld [vmem:[%s1 + $0x20] sm:$0xf]
        %v195 = vld [vmem:[%s1 + $0x24] sm:$0xf]
        %v196 = vld [vmem:[%s1 + $0x28] sm:$0xf]
        %v197 = vld [vmem:[%s1 + $0x2c] sm:$0xf]
        %v198 = vld [vmem:[%s1 + $0x30] sm:$0xf]
        %v199 = vld [vmem:[%s1 + $0x34] sm:$0xf]
        %v200 = vld [vmem:[%s1 + $0x38] sm:$0xf]
        %v201 = vld [vmem:[%s1 + $0x3c] sm:$0xf]
        %v202 = vld [vmem:[%s1 + $0x40] sm:$0xf]
        %v203 = vld [vmem:[%s1 + $0x44] sm:$0xf]
        %v204 = vld [vmem:[%s1 + $0x48] sm:$0xf]
        %v205 = vld [vmem:[%s1 + $0x4c] sm:$0xf]
        %v206 = vld [vmem:[%s1 + $0x50] sm:$0xf]
        %v207 = vld [vmem:[%s1 + $0x54] sm:$0xf]
        %v208 = vld [vmem:[%s1 + $0x58] sm:$0xf]
        %v209 = vld [vmem:[%s1 + $0x5c] sm:$0xf]
        %v210 = vld [vmem:[%s1 + $0x60] sm:$0xf]
        %v211 = vld [vmem:[%s1 + $0x64] sm:$0xf]
        %v212 = vld [vmem:[%s1 + $0x68] sm:$0xf]
        %v213 = vld [vmem:[%s1 + $0x6c] sm:$0xf]
        %v214 = vld [vmem:[%s1 + $0x70] sm:$0xf]
        %v215 = vld [vmem:[%s1 + $0x74] sm:$0xf]
        %v216 = vld [vmem:[%s1 + $0x78] sm:$0xf]
        %v217 = vld [vmem:[%s1 + $0x7c] sm:$0xf]
        %v218 = vunpack.c.l.bf16 %v202
        %v219 = vunpack.c.l.bf16 %v203
        %v220 = vunpack.c.l.bf16 %v204
        %v221 = vunpack.c.l.bf16 %v205
        %v222 = vunpack.c.l.bf16 %v206
        %v223 = vunpack.c.l.bf16 %v207
        %v224 = vunpack.c.l.bf16 %v208
        %v225 = vunpack.c.l.bf16 %v209
        %v226 = vunpack.c.l.bf16 %v210
        %v227 = vunpack.c.l.bf16 %v211
        %v228 = vunpack.c.l.bf16 %v212
        %v229 = vunpack.c.l.bf16 %v213
        %v230 = vunpack.c.l.bf16 %v214
        %v231 = vunpack.c.l.bf16 %v215
        %v232 = vunpack.c.l.bf16 %v216
        %v233 = vunpack.c.l.bf16 %v217
        %235 = vset.pattern.permute.xlu0 0
        %236 = vperm.xlu0 %235, %v218
        %v237 = vpop.permute.xlu0 %236
        %240 = vset.pattern.permute.xlu0 0
        %241 = vperm.xlu0 %240, %v219
        %v242 = vpop.permute.xlu0 %241
        %245 = vset.pattern.permute.xlu0 0
        %246 = vperm.xlu0 %245, %v220
        %v247 = vpop.permute.xlu0 %246
        %250 = vset.pattern.permute.xlu0 0
        %251 = vperm.xlu0 %250, %v221
        %v252 = vpop.permute.xlu0 %251
        %255 = vset.pattern.permute.xlu0 0
        %256 = vperm.xlu0 %255, %v222
        %v257 = vpop.permute.xlu0 %256
        %260 = vset.pattern.permute.xlu0 0
        %261 = vperm.xlu0 %260, %v223
        %v262 = vpop.permute.xlu0 %261
        %265 = vset.pattern.permute.xlu0 0
        %266 = vperm.xlu0 %265, %v224
        %v267 = vpop.permute.xlu0 %266
        %270 = vset.pattern.permute.xlu0 0
        %271 = vperm.xlu0 %270, %v225
        %v272 = vpop.permute.xlu0 %271
        %275 = vset.pattern.permute.xlu0 0
        %276 = vperm.xlu0 %275, %v226
        %v277 = vpop.permute.xlu0 %276
        %280 = vset.pattern.permute.xlu0 0
        %281 = vperm.xlu0 %280, %v227
        %v282 = vpop.permute.xlu0 %281
        %285 = vset.pattern.permute.xlu0 0
        %286 = vperm.xlu0 %285, %v228
        %v287 = vpop.permute.xlu0 %286
        %290 = vset.pattern.permute.xlu0 0
        %291 = vperm.xlu0 %290, %v229
        %v292 = vpop.permute.xlu0 %291
        %295 = vset.pattern.permute.xlu0 0
        %296 = vperm.xlu0 %295, %v230
        %v297 = vpop.permute.xlu0 %296
        %300 = vset.pattern.permute.xlu0 0
        %301 = vperm.xlu0 %300, %v231
        %v302 = vpop.permute.xlu0 %301
        %305 = vset.pattern.permute.xlu0 0
        %306 = vperm.xlu0 %305, %v232
        %v307 = vpop.permute.xlu0 %306
        %310 = vset.pattern.permute.xlu0 0
        %311 = vperm.xlu0 %310, %v233
        %v312 = vpop.permute.xlu0 %311
        %v330 = vunpack.c.l.b16 %v186
        %v331 = vunpack.c.l.b16 %v187
        %v332 = vunpack.c.l.b16 %v188
        %v333 = vunpack.c.l.b16 %v189
        %v334 = vunpack.c.l.b16 %v190
        %v335 = vunpack.c.l.b16 %v191
        %v336 = vunpack.c.l.b16 %v192
        %v337 = vunpack.c.l.b16 %v193
        %v338 = vunpack.c.l.b16 %v194
        %v339 = vunpack.c.l.b16 %v195
        %v340 = vunpack.c.l.b16 %v196
        %v341 = vunpack.c.l.b16 %v197
        %v342 = vunpack.c.l.b16 %v198
        %v343 = vunpack.c.l.b16 %v199
        %v344 = vunpack.c.l.b16 %v200
        %v345 = vunpack.c.l.b16 %v201
        %v346 = vpack.c.b16 %v331, %v330
        %v347 = vpack.c.b16 %v333, %v332
        %v348 = vpack.c.b16 %v335, %v334
        %v349 = vpack.c.b16 %v337, %v336
        %v350 = vpack.c.b16 %v339, %v338
        %v351 = vpack.c.b16 %v341, %v340
        %v352 = vpack.c.b16 %v343, %v342
        %v353 = vpack.c.b16 %v345, %v344
        %v356 = vunpack.c.l.b16 %v184
        %v357 = vunpack.c.h.b16 %v184
        %v358 = vunpack.c.l.b16 %v185
        %v359 = vunpack.c.h.b16 %v185
        %v360 = vpack.c.b16 %v358, %v356
        %v361 = vpack.c.b16 %v359, %v357
        %vm364 = vcmask 130048
        %v366 = vsel %vm364, %v346, 0
        %v369 = vsel %vm364, %v347, 0
        %v372 = vsel %vm364, %v348, 0
        %v375 = vsel %vm364, %v349, 0
        %v378 = vsel %vm364, %v350, 0
        %v381 = vsel %vm364, %v351, 0
        %v384 = vsel %vm364, %v352, 0
        %v387 = vsel %vm364, %v353, 0
        %389 = vmatprep.subr.bf16.mxu0 %v361
        %390 = vmatpush1.bf16.msra.mxu0 %v360
        %391 = vmatprep.subr.bf16.mxu0 0
        %392 = vmatpush1.bf16.msra.mxu0 0
        %393 = vmatprep.subr.bf16.mxu0 0
        %394 = vmatpush1.bf16.msra.mxu0 0
        %395 = vmatprep.subr.bf16.mxu0 0
        %396 = vmatpush1.bf16.msra.mxu0 0
        %397 = vmatprep.subr.bf16.mxu0 0
        %398 = vmatpush1.bf16.msra.mxu0 0
        %399 = vmatprep.subr.bf16.mxu0 0
        %400 = vmatpush1.bf16.msra.mxu0 0
        %401 = vmatprep.subr.bf16.mxu0 0
        %402 = vmatpush1.bf16.msra.mxu0 0
        %403 = vmatprep.subr.bf16.mxu0 0
        %404 = vmatpush1.bf16.msra.mxu0 0
        %405 = vmatprep.subr.bf16.mxu0 0
        %406 = vmatpush1.bf16.msra.mxu0 0
        %407 = vmatprep.subr.bf16.mxu0 0
        %408 = vmatpush1.bf16.msra.mxu0 0
        %409 = vmatprep.subr.bf16.mxu0 0
        %410 = vmatpush1.bf16.msra.mxu0 0
        %411 = vmatprep.subr.bf16.mxu0 0
        %412 = vmatpush1.bf16.msra.mxu0 0
        %413 = vmatprep.subr.bf16.mxu0 0
        %414 = vmatpush1.bf16.msra.mxu0 0
        %415 = vmatprep.subr.bf16.mxu0 0
        %416 = vmatpush1.bf16.msra.mxu0 0
        %417 = vmatprep.subr.bf16.mxu0 0
        %418 = vmatpush1.bf16.msra.mxu0 0
        %419 = vmatprep.subr.bf16.mxu0 0
        %420 = vmatpush1.bf16.msra.mxu0 0
        %421 = vmatprep.mubr.bf16.mxu0 0
        %422 = vmatmul.mubr.bf16.gmra.mrb[0].mxu0 %v366
        %v423 = vpop.f32.mrb[0].mxu0
        %v424 = vadd.f32 %v237, %v423
        %v425 = vpop.f32.mrb[0].mxu0
        %v426 = vadd.f32 %v237, %v425
        %v427 = vpop.f32.mrb[0].mxu0
        %v428 = vadd.f32 %v242, %v427
        %v429 = vpop.f32.mrb[0].mxu0
        %v430 = vadd.f32 %v242, %v429
        %431 = vmatprep.mubr.bf16.mxu0 0
        %432 = vmatmul.mubr.bf16.gmra.mrb[0].mxu0 %v369
        %v433 = vpop.f32.mrb[0].mxu0
        %v434 = vadd.f32 %v247, %v433
        %v435 = vpop.f32.mrb[0].mxu0
        %v436 = vadd.f32 %v247, %v435
        %v437 = vpop.f32.mrb[0].mxu0
        %v438 = vadd.f32 %v252, %v437
        %v439 = vpop.f32.mrb[0].mxu0
        %v440 = vadd.f32 %v252, %v439
        %441 = vmatprep.mubr.bf16.mxu0 0
        %442 = vmatmul.mubr.bf16.gmra.mrb[0].mxu0 %v372
        %v443 = vpop.f32.mrb[0].mxu0
        %v444 = vadd.f32 %v257, %v443
        %v445 = vpop.f32.mrb[0].mxu0
        %v446 = vadd.f32 %v257, %v445
        %v447 = vpop.f32.mrb[0].mxu0
        %v448 = vadd.f32 %v262, %v447
        %v449 = vpop.f32.mrb[0].mxu0
        %v450 = vadd.f32 %v262, %v449
        %451 = vmatprep.mubr.bf16.mxu0 0
        %452 = vmatmul.mubr.bf16.gmra.mrb[0].mxu0 %v375
        %v453 = vpop.f32.mrb[0].mxu0
        %v454 = vadd.f32 %v267, %v453
        %v455 = vpop.f32.mrb[0].mxu0
        %v456 = vadd.f32 %v267, %v455
        %v457 = vpop.f32.mrb[0].mxu0
        %v458 = vadd.f32 %v272, %v457
        %v459 = vpop.f32.mrb[0].mxu0
        %v460 = vadd.f32 %v272, %v459
        %461 = vmatprep.mubr.bf16.mxu0 0
        %462 = vmatmul.mubr.bf16.gmra.mrb[0].mxu0 %v378
        %v463 = vpop.f32.mrb[0].mxu0
        %v464 = vadd.f32 %v277, %v463
        %v465 = vpop.f32.mrb[0].mxu0
        %v466 = vadd.f32 %v277, %v465
        %v467 = vpop.f32.mrb[0].mxu0
        %v468 = vadd.f32 %v282, %v467
        %v469 = vpop.f32.mrb[0].mxu0
        %v470 = vadd.f32 %v282, %v469
        %471 = vmatprep.mubr.bf16.mxu0 0
        %472 = vmatmul.mubr.bf16.gmra.mrb[0].mxu0 %v381
        %v473 = vpop.f32.mrb[0].mxu0
        %v474 = vadd.f32 %v287, %v473
        %v475 = vpop.f32.mrb[0].mxu0
        %v476 = vadd.f32 %v287, %v475
        %v477 = vpop.f32.mrb[0].mxu0
        %v478 = vadd.f32 %v292, %v477
        %v479 = vpop.f32.mrb[0].mxu0
        %v480 = vadd.f32 %v292, %v479
        %481 = vmatprep.mubr.bf16.mxu0 0
        %482 = vmatmul.mubr.bf16.gmra.mrb[0].mxu0 %v384
        %v483 = vpop.f32.mrb[0].mxu0
        %v484 = vadd.f32 %v297, %v483
        %v485 = vpop.f32.mrb[0].mxu0
        %v486 = vadd.f32 %v297, %v485
        %v487 = vpop.f32.mrb[0].mxu0
        %v488 = vadd.f32 %v302, %v487
        %v489 = vpop.f32.mrb[0].mxu0
        %v490 = vadd.f32 %v302, %v489
        %491 = vmatprep.mubr.bf16.mxu0 0
        %492 = vmatmul.mubr.bf16.gmra.mrb[0].mxu0 %v387
        %v493 = vpop.f32.mrb[0].mxu0
        %v494 = vadd.f32 %v307, %v493
        %v495 = vpop.f32.mrb[0].mxu0
        %v496 = vadd.f32 %v307, %v495
        %v497 = vpop.f32.mrb[0].mxu0
        %v498 = vadd.f32 %v312, %v497
        %v499 = vpop.f32.mrb[0].mxu0
        %v500 = vadd.f32 %v312, %v499
        %501 = vdwg.mxu0
        %v502 = vtanh.pop %v424
        %v503 = vtanh.pop %v426
        %v504 = vtanh.pop %v428
        %v505 = vtanh.pop %v430
        %v506 = vtanh.pop %v434
        %v507 = vtanh.pop %v436
        %v508 = vtanh.pop %v438
        %v509 = vtanh.pop %v440
        %v510 = vtanh.pop %v444
        %v511 = vtanh.pop %v446
        %v512 = vtanh.pop %v448
        %v513 = vtanh.pop %v450
        %v514 = vtanh.pop %v454
        %v515 = vtanh.pop %v456
        %v516 = vtanh.pop %v458
        %v517 = vtanh.pop %v460
        %v518 = vtanh.pop %v464
        %v519 = vtanh.pop %v466
        %v520 = vtanh.pop %v468
        %v521 = vtanh.pop %v470
        %v522 = vtanh.pop %v474
        %v523 = vtanh.pop %v476
        %v524 = vtanh.pop %v478
        %v525 = vtanh.pop %v480
        %v526 = vtanh.pop %v484
        %v527 = vtanh.pop %v486
        %v528 = vtanh.pop %v488
        %v529 = vtanh.pop %v490
        %v530 = vtanh.pop %v494
        %v531 = vtanh.pop %v496
        %v532 = vtanh.pop %v498
        %v533 = vtanh.pop %v500
        %v534 = vpack.c.bf16 %v504, %v502
        %v535 = vpack.c.bf16 %v505, %v503
        %v536 = vpack.c.bf16 %v508, %v506
        %v537 = vpack.c.bf16 %v509, %v507
        %v538 = vpack.c.bf16 %v512, %v510
        %v539 = vpack.c.bf16 %v513, %v511
        %v540 = vpack.c.bf16 %v516, %v514
        %v541 = vpack.c.bf16 %v517, %v515
        %v542 = vpack.c.bf16 %v520, %v518
        %v543 = vpack.c.bf16 %v521, %v519
        %v544 = vpack.c.bf16 %v524, %v522
        %v545 = vpack.c.bf16 %v525, %v523
        %v546 = vpack.c.bf16 %v528, %v526
        %v547 = vpack.c.bf16 %v529, %v527
        %v548 = vpack.c.bf16 %v532, %v530
        %v549 = vpack.c.bf16 %v533, %v531
        %v550 = vld [vmem:[%s1 + $0x80] sm:$0xf]
        %v551 = vld [vmem:[%s1 + $0x84] sm:$0xf]
        %v552 = vld [vmem:[%s1 + $0x88] sm:$0xf]
        %v553 = vld [vmem:[%s1 + $0x8c] sm:$0xf]
        %v554 = vld [vmem:[%s1 + $0x90] sm:$0xf]
        %v555 = vld [vmem:[%s1 + $0x94] sm:$0xf]
        %v556 = vld [vmem:[%s1 + $0x98] sm:$0xf]
        %v557 = vld [vmem:[%s1 + $0x9c] sm:$0xf]
        %v558 = vld [vmem:[%s1 + $0xa0] sm:$0xf]
        %v559 = vld [vmem:[%s1 + $0xa4] sm:$0xf]
        %v560 = vld [vmem:[%s1 + $0xa8] sm:$0xf]
        %v561 = vld [vmem:[%s1 + $0xac] sm:$0xf]
        %v562 = vld [vmem:[%s1 + $0xb0] sm:$0xf]
        %v563 = vld [vmem:[%s1 + $0xb4] sm:$0xf]
        %v564 = vld [vmem:[%s1 + $0xb8] sm:$0xf]
        %v565 = vld [vmem:[%s1 + $0xbc] sm:$0xf]
        %v566 = vld [vmem:[%s1 + $0xc0] sm:$0xf]
        %v567 = vld [vmem:[%s1 + $0xc4] sm:$0xf]
        %v568 = vld [vmem:[%s1 + $0xc8] sm:$0xf]
        %v569 = vld [vmem:[%s1 + $0xcc] sm:$0xf]
        %v570 = vld [vmem:[%s1 + $0xd0] sm:$0xf]
        %v571 = vld [vmem:[%s1 + $0xd4] sm:$0xf]
        %v572 = vld [vmem:[%s1 + $0xd8] sm:$0xf]
        %v573 = vld [vmem:[%s1 + $0xdc] sm:$0xf]
        %v574 = vld [vmem:[%s1 + $0xe0] sm:$0xf]
        %v575 = vld [vmem:[%s1 + $0xe4] sm:$0xf]
        %v576 = vld [vmem:[%s1 + $0xe8] sm:$0xf]
        %v577 = vld [vmem:[%s1 + $0xec] sm:$0xf]
        %v578 = vld [vmem:[%s1 + $0xf0] sm:$0xf]
        %v579 = vld [vmem:[%s1 + $0xf4] sm:$0xf]
        %v580 = vld [vmem:[%s1 + $0xf8] sm:$0xf]
        %v581 = vld [vmem:[%s1 + $0xfc] sm:$0xf]
        %v582 = vunpack.c.l.bf16 %v566
        %v583 = vunpack.c.l.bf16 %v567
        %v584 = vunpack.c.l.bf16 %v568
        %v585 = vunpack.c.l.bf16 %v569
        %v586 = vunpack.c.l.bf16 %v570
        %v587 = vunpack.c.l.bf16 %v571
        %v588 = vunpack.c.l.bf16 %v572
        %v589 = vunpack.c.l.bf16 %v573
        %v590 = vunpack.c.l.bf16 %v574
        %v591 = vunpack.c.l.bf16 %v575
        %v592 = vunpack.c.l.bf16 %v576
        %v593 = vunpack.c.l.bf16 %v577
        %v594 = vunpack.c.l.bf16 %v578
        %v595 = vunpack.c.l.bf16 %v579
        %v596 = vunpack.c.l.bf16 %v580
        %v597 = vunpack.c.l.bf16 %v581
        %599 = vset.pattern.permute.xlu0 0
        %600 = vperm.xlu0 %599, %v582
        %v601 = vpop.permute.xlu0 %600
        %604 = vset.pattern.permute.xlu0 0
        %605 = vperm.xlu0 %604, %v583
        %v606 = vpop.permute.xlu0 %605
        %609 = vset.pattern.permute.xlu0 0
        %610 = vperm.xlu0 %609, %v584
        %v611 = vpop.permute.xlu0 %610
        %614 = vset.pattern.permute.xlu0 0
        %615 = vperm.xlu0 %614, %v585
        %v616 = vpop.permute.xlu0 %615
        %619 = vset.pattern.permute.xlu0 0
        %620 = vperm.xlu0 %619, %v586
        %v621 = vpop.permute.xlu0 %620
        %624 = vset.pattern.permute.xlu0 0
        %625 = vperm.xlu0 %624, %v587
        %v626 = vpop.permute.xlu0 %625
        %629 = vset.pattern.permute.xlu0 0
        %630 = vperm.xlu0 %629, %v588
        %v631 = vpop.permute.xlu0 %630
        %634 = vset.pattern.permute.xlu0 0
        %635 = vperm.xlu0 %634, %v589
        %v636 = vpop.permute.xlu0 %635
        %639 = vset.pattern.permute.xlu0 0
        %640 = vperm.xlu0 %639, %v590
        %v641 = vpop.permute.xlu0 %640
        %644 = vset.pattern.permute.xlu0 0
        %645 = vperm.xlu0 %644, %v591
        %v646 = vpop.permute.xlu0 %645
        %649 = vset.pattern.permute.xlu0 0
        %650 = vperm.xlu0 %649, %v592
        %v651 = vpop.permute.xlu0 %650
        %654 = vset.pattern.permute.xlu0 0
        %655 = vperm.xlu0 %654, %v593
        %v656 = vpop.permute.xlu0 %655
        %659 = vset.pattern.permute.xlu0 0
        %660 = vperm.xlu0 %659, %v594
        %v661 = vpop.permute.xlu0 %660
        %664 = vset.pattern.permute.xlu0 0
        %665 = vperm.xlu0 %664, %v595
        %v666 = vpop.permute.xlu0 %665
        %669 = vset.pattern.permute.xlu0 0
        %670 = vperm.xlu0 %669, %v596
        %v671 = vpop.permute.xlu0 %670
        %674 = vset.pattern.permute.xlu0 0
        %675 = vperm.xlu0 %674, %v597
        %v676 = vpop.permute.xlu0 %675
        %v694 = vunpack.c.l.b16 %v550
        %v695 = vunpack.c.l.b16 %v551
        %v696 = vunpack.c.l.b16 %v552
        %v697 = vunpack.c.l.b16 %v553
        %v698 = vunpack.c.l.b16 %v554
        %v699 = vunpack.c.l.b16 %v555
        %v700 = vunpack.c.l.b16 %v556
        %v701 = vunpack.c.l.b16 %v557
        %v702 = vunpack.c.l.b16 %v558
        %v703 = vunpack.c.l.b16 %v559
        %v704 = vunpack.c.l.b16 %v560
        %v705 = vunpack.c.l.b16 %v561
        %v706 = vunpack.c.l.b16 %v562
        %v707 = vunpack.c.l.b16 %v563
        %v708 = vunpack.c.l.b16 %v564
        %v709 = vunpack.c.l.b16 %v565
        %v710 = vpack.c.b16 %v695, %v694
        %v711 = vpack.c.b16 %v697, %v696
        %v712 = vpack.c.b16 %v699, %v698
        %v713 = vpack.c.b16 %v701, %v700
        %v714 = vpack.c.b16 %v703, %v702
        %v715 = vpack.c.b16 %v705, %v704
        %v716 = vpack.c.b16 %v707, %v706
        %v717 = vpack.c.b16 %v709, %v708
        %726 = vmatprep.subr.bf16.mxu0 %v535
        %727 = vmatpush1.bf16.msra.mxu0 %v534
        %728 = vmatprep.subr.bf16.mxu0 %v537
        %729 = vmatpush1.bf16.msra.mxu0 %v536
        %730 = vmatprep.subr.bf16.mxu0 %v539
        %731 = vmatpush1.bf16.msra.mxu0 %v538
        %732 = vmatprep.subr.bf16.mxu0 %v541
        %733 = vmatpush1.bf16.msra.mxu0 %v540
        %734 = vmatprep.subr.bf16.mxu0 %v543
        %735 = vmatpush1.bf16.msra.mxu0 %v542
        %736 = vmatprep.subr.bf16.mxu0 %v545
        %737 = vmatpush1.bf16.msra.mxu0 %v544
        %738 = vmatprep.subr.bf16.mxu0 %v547
        %739 = vmatpush1.bf16.msra.mxu0 %v546
        %740 = vmatprep.subr.bf16.mxu0 %v549
        %741 = vmatpush1.bf16.msra.mxu0 %v548
        %742 = vmatprep.subr.bf16.mxu0 0
        %743 = vmatpush1.bf16.msra.mxu0 0
        %744 = vmatprep.subr.bf16.mxu0 0
        %745 = vmatpush1.bf16.msra.mxu0 0
        %746 = vmatprep.subr.bf16.mxu0 0
        %747 = vmatpush1.bf16.msra.mxu0 0
        %748 = vmatprep.subr.bf16.mxu0 0
        %749 = vmatpush1.bf16.msra.mxu0 0
        %750 = vmatprep.subr.bf16.mxu0 0
        %751 = vmatpush1.bf16.msra.mxu0 0
        %752 = vmatprep.subr.bf16.mxu0 0
        %753 = vmatpush1.bf16.msra.mxu0 0
        %754 = vmatprep.subr.bf16.mxu0 0
        %755 = vmatpush1.bf16.msra.mxu0 0
        %756 = vmatprep.subr.bf16.mxu0 0
        %757 = vmatpush1.bf16.msra.mxu0 0
        %758 = vmatprep.mubr.bf16.mxu0 0
        %759 = vmatmul.mubr.bf16.gmra.mrb[0].mxu0 %v710
        %v760 = vpop.f32.mrb[0].mxu0
        %v761 = vadd.f32 %v601, %v760
        %v762 = vpop.f32.mrb[0].mxu0
        %v763 = vadd.f32 %v601, %v762
        %v764 = vpop.f32.mrb[0].mxu0
        %v765 = vadd.f32 %v606, %v764
        %v766 = vpop.f32.mrb[0].mxu0
        %v767 = vadd.f32 %v606, %v766
        %768 = vmatprep.mubr.bf16.mxu0 0
        %769 = vmatmul.mubr.bf16.gmra.mrb[0].mxu0 %v711
        %v770 = vpop.f32.mrb[0].mxu0
        %v771 = vadd.f32 %v611, %v770
        %v772 = vpop.f32.mrb[0].mxu0
        %v773 = vadd.f32 %v611, %v772
        %v774 = vpop.f32.mrb[0].mxu0
        %v775 = vadd.f32 %v616, %v774
        %v776 = vpop.f32.mrb[0].mxu0
        %v777 = vadd.f32 %v616, %v776
        %778 = vmatprep.mubr.bf16.mxu0 0
        %779 = vmatmul.mubr.bf16.gmra.mrb[0].mxu0 %v712
        %v780 = vpop.f32.mrb[0].mxu0
        %v781 = vadd.f32 %v621, %v780
        %v782 = vpop.f32.mrb[0].mxu0
        %v783 = vadd.f32 %v621, %v782
        %v784 = vpop.f32.mrb[0].mxu0
        %v785 = vadd.f32 %v626, %v784
        %v786 = vpop.f32.mrb[0].mxu0
        %v787 = vadd.f32 %v626, %v786
        %788 = vmatprep.mubr.bf16.mxu0 0
        %789 = vmatmul.mubr.bf16.gmra.mrb[0].mxu0 %v713
        %v790 = vpop.f32.mrb[0].mxu0
        %v791 = vadd.f32 %v631, %v790
        %v792 = vpop.f32.mrb[0].mxu0
        %v793 = vadd.f32 %v631, %v792
        %v794 = vpop.f32.mrb[0].mxu0
        %v795 = vadd.f32 %v636, %v794
        %v796 = vpop.f32.mrb[0].mxu0
        %v797 = vadd.f32 %v636, %v796
        %798 = vmatprep.mubr.bf16.mxu0 0
        %799 = vmatmul.mubr.bf16.gmra.mrb[0].mxu0 %v714
        %v800 = vpop.f32.mrb[0].mxu0
        %v801 = vadd.f32 %v641, %v800
        %v802 = vpop.f32.mrb[0].mxu0
        %v803 = vadd.f32 %v641, %v802
        %v804 = vpop.f32.mrb[0].mxu0
        %v805 = vadd.f32 %v646, %v804
        %v806 = vpop.f32.mrb[0].mxu0
        %v807 = vadd.f32 %v646, %v806
        %808 = vmatprep.mubr.bf16.mxu0 0
        %809 = vmatmul.mubr.bf16.gmra.mrb[0].mxu0 %v715
        %v810 = vpop.f32.mrb[0].mxu0
        %v811 = vadd.f32 %v651, %v810
        %v812 = vpop.f32.mrb[0].mxu0
        %v813 = vadd.f32 %v651, %v812
        %v814 = vpop.f32.mrb[0].mxu0
        %v815 = vadd.f32 %v656, %v814
        %v816 = vpop.f32.mrb[0].mxu0
        %v817 = vadd.f32 %v656, %v816
        %818 = vmatprep.mubr.bf16.mxu0 0
        %819 = vmatmul.mubr.bf16.gmra.mrb[0].mxu0 %v716
        %v820 = vpop.f32.mrb[0].mxu0
        %v821 = vadd.f32 %v661, %v820
        %v822 = vpop.f32.mrb[0].mxu0
        %v823 = vadd.f32 %v661, %v822
        %v824 = vpop.f32.mrb[0].mxu0
        %v825 = vadd.f32 %v666, %v824
        %v826 = vpop.f32.mrb[0].mxu0
        %v827 = vadd.f32 %v666, %v826
        %828 = vmatprep.mubr.bf16.mxu0 0
        %829 = vmatmul.mubr.bf16.gmra.mrb[0].mxu0 %v717
        %v830 = vpop.f32.mrb[0].mxu0
        %v831 = vadd.f32 %v671, %v830
        %v832 = vpop.f32.mrb[0].mxu0
        %v833 = vadd.f32 %v671, %v832
        %v834 = vpop.f32.mrb[0].mxu0
        %v835 = vadd.f32 %v676, %v834
        %v836 = vpop.f32.mrb[0].mxu0
        %v837 = vadd.f32 %v676, %v836
        %838 = vdwg.mxu0
        %v839 = vtanh.pop %v761
        %v840 = vtanh.pop %v763
        %v841 = vtanh.pop %v765
        %v842 = vtanh.pop %v767
        %v843 = vtanh.pop %v771
        %v844 = vtanh.pop %v773
        %v845 = vtanh.pop %v775
        %v846 = vtanh.pop %v777
        %v847 = vtanh.pop %v781
        %v848 = vtanh.pop %v783
        %v849 = vtanh.pop %v785
        %v850 = vtanh.pop %v787
        %v851 = vtanh.pop %v791
        %v852 = vtanh.pop %v793
        %v853 = vtanh.pop %v795
        %v854 = vtanh.pop %v797
        %v855 = vtanh.pop %v801
        %v856 = vtanh.pop %v803
        %v857 = vtanh.pop %v805
        %v858 = vtanh.pop %v807
        %v859 = vtanh.pop %v811
        %v860 = vtanh.pop %v813
        %v861 = vtanh.pop %v815
        %v862 = vtanh.pop %v817
        %v863 = vtanh.pop %v821
        %v864 = vtanh.pop %v823
        %v865 = vtanh.pop %v825
        %v866 = vtanh.pop %v827
        %v867 = vtanh.pop %v831
        %v868 = vtanh.pop %v833
        %v869 = vtanh.pop %v835
        %v870 = vtanh.pop %v837
        %v871 = vpack.c.bf16 %v841, %v839
        %v872 = vpack.c.bf16 %v842, %v840
        %v873 = vpack.c.bf16 %v845, %v843
        %v874 = vpack.c.bf16 %v846, %v844
        %v875 = vpack.c.bf16 %v849, %v847
        %v876 = vpack.c.bf16 %v850, %v848
        %v877 = vpack.c.bf16 %v853, %v851
        %v878 = vpack.c.bf16 %v854, %v852
        %v879 = vpack.c.bf16 %v857, %v855
        %v880 = vpack.c.bf16 %v858, %v856
        %v881 = vpack.c.bf16 %v861, %v859
        %v882 = vpack.c.bf16 %v862, %v860
        %v883 = vpack.c.bf16 %v865, %v863
        %v884 = vpack.c.bf16 %v866, %v864
        %v885 = vpack.c.bf16 %v869, %v867
        %v886 = vpack.c.bf16 %v870, %v868
        %v887 = vld [vmem:[%s1 + $0x100] sm:$0xf]
        %v888 = vld [vmem:[%s1 + $0x108] sm:$0xf]
        %v889 = vunpack.c.l.bf16 %v888
        %891 = vset.pattern.permute.xlu0 0
        %892 = vperm.xlu0 %891, %v889
        %v893 = vpop.permute.xlu0 %892
        %895 = vmatprep.subr.bf16.mxu0 %v872
        %896 = vmatpush1.bf16.msra.mxu0 %v871
        %897 = vmatprep.subr.bf16.mxu0 %v874
        %898 = vmatpush1.bf16.msra.mxu0 %v873
        %899 = vmatprep.subr.bf16.mxu0 %v876
        %900 = vmatpush1.bf16.msra.mxu0 %v875
        %901 = vmatprep.subr.bf16.mxu0 %v878
        %902 = vmatpush1.bf16.msra.mxu0 %v877
        %903 = vmatprep.subr.bf16.mxu0 %v880
        %904 = vmatpush1.bf16.msra.mxu0 %v879
        %905 = vmatprep.subr.bf16.mxu0 %v882
        %906 = vmatpush1.bf16.msra.mxu0 %v881
        %907 = vmatprep.subr.bf16.mxu0 %v884
        %908 = vmatpush1.bf16.msra.mxu0 %v883
        %909 = vmatprep.subr.bf16.mxu0 %v886
        %910 = vmatpush1.bf16.msra.mxu0 %v885
        %911 = vmatprep.subr.bf16.mxu0 0
        %912 = vmatpush1.bf16.msra.mxu0 0
        %913 = vmatprep.subr.bf16.mxu0 0
        %914 = vmatpush1.bf16.msra.mxu0 0
        %915 = vmatprep.subr.bf16.mxu0 0
        %916 = vmatpush1.bf16.msra.mxu0 0
        %917 = vmatprep.subr.bf16.mxu0 0
        %918 = vmatpush1.bf16.msra.mxu0 0
        %919 = vmatprep.subr.bf16.mxu0 0
        %920 = vmatpush1.bf16.msra.mxu0 0
        %921 = vmatprep.subr.bf16.mxu0 0
        %922 = vmatpush1.bf16.msra.mxu0 0
        %923 = vmatprep.subr.bf16.mxu0 0
        %924 = vmatpush1.bf16.msra.mxu0 0
        %925 = vmatprep.subr.bf16.mxu0 0
        %926 = vmatpush1.bf16.msra.mxu0 0
        %927 = vmatprep.mubr.bf16.mxu0 0
        %928 = vmatmul.mubr.bf16.gmra.mrb[0].mxu0 %v887
        %v929 = vpop.f32.mrb[0].mxu0
        %v930 = vadd.f32 %v893, %v929
        %v931 = vpop.f32.mrb[0].mxu0
        %v932 = vadd.f32 %v893, %v931
        %v933 = vpop.f32.mrb[0].mxu0
        %v934 = vpop.f32.mrb[0].mxu0
        %935 = vdwg.mxu0
        %v936 = vmul.f32 %v930, 0.5
        %v937 = vmul.f32 %v932, 0.5
        %v938 = vtanh.pop %v936
        %v939 = vtanh.pop %v937
        %v940 = vadd.f32 %v938, 1.0
        %v941 = vadd.f32 %v939, 1.0
        %v942 = vmul.f32 %v940, 0.5
        %v943 = vmul.f32 %v941, 0.5
        %v944 = vpack.c.bf16 %v942, %v942
        %v945 = vpack.c.bf16 %v943, %v943
        %v946 = vld [vmem:[%s1 + $0x110] sm:$0xf]
        %v947 = vld [vmem:[%s1 + $0x114] sm:$0xf]
        %v948 = vld [vmem:[%s1 + $0x118] sm:$0xf]
        %v949 = vld [vmem:[%s1 + $0x11c] sm:$0xf]
        %v950 = vunpack.c.l.bf16 %v948
        %v951 = vunpack.c.l.bf16 %v949
        %953 = vset.pattern.permute.xlu0 0
        %954 = vperm.xlu0 %953, %v950
        %v955 = vpop.permute.xlu0 %954
        %958 = vset.pattern.permute.xlu0 0
        %959 = vperm.xlu0 %958, %v951
        %v960 = vpop.permute.xlu0 %959
        %v964 = vunpack.c.l.b16 %v946
        %v965 = vunpack.c.l.b16 %v947
        %v966 = vpack.c.b16 %v965, %v964
        %vm967 = vcmask 64512
        %v969 = vsel %vm967, %v966, 0
        %vm971 = vcmask 1043456
        %v973 = vsel %vm971, %v944, 0
        %v976 = vsel %vm971, %v945, 0
        %978 = vmatprep.subr.bf16.mxu0 %v976
        %979 = vmatpush1.bf16.msra.mxu0 %v973
        %980 = vmatprep.subr.bf16.mxu0 0
        %981 = vmatpush1.bf16.msra.mxu0 0
        %982 = vmatprep.subr.bf16.mxu0 0
        %983 = vmatpush1.bf16.msra.mxu0 0
        %984 = vmatprep.subr.bf16.mxu0 0
        %985 = vmatpush1.bf16.msra.mxu0 0
        %986 = vmatprep.subr.bf16.mxu0 0
        %987 = vmatpush1.bf16.msra.mxu0 0
        %988 = vmatprep.subr.bf16.mxu0 0
        %989 = vmatpush1.bf16.msra.mxu0 0
        %990 = vmatprep.subr.bf16.mxu0 0
        %991 = vmatpush1.bf16.msra.mxu0 0
        %992 = vmatprep.subr.bf16.mxu0 0
        %993 = vmatpush1.bf16.msra.mxu0 0
        %994 = vmatprep.subr.bf16.mxu0 0
        %995 = vmatpush1.bf16.msra.mxu0 0
        %996 = vmatprep.subr.bf16.mxu0 0
        %997 = vmatpush1.bf16.msra.mxu0 0
        %998 = vmatprep.subr.bf16.mxu0 0
        %999 = vmatpush1.bf16.msra.mxu0 0
        %1000 = vmatprep.subr.bf16.mxu0 0
        %1001 = vmatpush1.bf16.msra.mxu0 0
        %1002 = vmatprep.subr.bf16.mxu0 0
        %1003 = vmatpush1.bf16.msra.mxu0 0
        %1004 = vmatprep.subr.bf16.mxu0 0
        %1005 = vmatpush1.bf16.msra.mxu0 0
        %1006 = vmatprep.subr.bf16.mxu0 0
        %1007 = vmatpush1.bf16.msra.mxu0 0
        %1008 = vmatprep.subr.bf16.mxu0 0
        %1009 = vmatpush1.bf16.msra.mxu0 0
        %1010 = vmatprep.mubr.bf16.mxu0 0
        %1011 = vmatmul.mubr.bf16.gmra.mrb[0].mxu0 %v969
        %v1012 = vpop.f32.mrb[0].mxu0
        %v1013 = vadd.f32 %v955, %v1012
        %v1014 = vpop.f32.mrb[0].mxu0
        %v1015 = vadd.f32 %v955, %v1014
        %v1016 = vpop.f32.mrb[0].mxu0
        %v1017 = vadd.f32 %v960, %v1016
        %v1018 = vpop.f32.mrb[0].mxu0
        %v1019 = vadd.f32 %v960, %v1018
        %1020 = vdwg.mxu0
        %v1021 = vtanh.pop %v1013
        %v1022 = vtanh.pop %v1015
        %v1023 = vtanh.pop %v1017
        %v1024 = vtanh.pop %v1019
        %v1025 = vpack.c.bf16 %v1023, %v1021
        %v1026 = vpack.c.bf16 %v1024, %v1022
        %v1027 = vld [vmem:[%s1 + $0x120] sm:$0xf]
        %v1028 = vld [vmem:[%s1 + $0x124] sm:$0xf]
        %v1029 = vld [vmem:[%s1 + $0x128] sm:$0xf]
        %v1030 = vld [vmem:[%s1 + $0x12c] sm:$0xf]
        %v1031 = vunpack.c.l.bf16 %v1029
        %v1032 = vunpack.c.l.bf16 %v1030
        %1034 = vset.pattern.permute.xlu0 0
        %1035 = vperm.xlu0 %1034, %v1031
        %v1036 = vpop.permute.xlu0 %1035
        %1039 = vset.pattern.permute.xlu0 0
        %1040 = vperm.xlu0 %1039, %v1032
        %v1041 = vpop.permute.xlu0 %1040
        %v1045 = vunpack.c.l.b16 %v1027
        %v1046 = vunpack.c.l.b16 %v1028
        %v1047 = vpack.c.b16 %v1046, %v1045
        %v1049 = vsel %vm364, %v1047, 0
        %1051 = vmatprep.subr.bf16.mxu0 %v1026
        %1052 = vmatpush1.bf16.msra.mxu0 %v1025
        %1053 = vmatprep.subr.bf16.mxu0 0
        %1054 = vmatpush1.bf16.msra.mxu0 0
        %1055 = vmatprep.subr.bf16.mxu0 0
        %1056 = vmatpush1.bf16.msra.mxu0 0
        %1057 = vmatprep.subr.bf16.mxu0 0
        %1058 = vmatpush1.bf16.msra.mxu0 0
        %1059 = vmatprep.subr.bf16.mxu0 0
        %1060 = vmatpush1.bf16.msra.mxu0 0
        %1061 = vmatprep.subr.bf16.mxu0 0
        %1062 = vmatpush1.bf16.msra.mxu0 0
        %1063 = vmatprep.subr.bf16.mxu0 0
        %1064 = vmatpush1.bf16.msra.mxu0 0
        %1065 = vmatprep.subr.bf16.mxu0 0
        %1066 = vmatpush1.bf16.msra.mxu0 0
        %1067 = vmatprep.subr.bf16.mxu0 0
        %1068 = vmatpush1.bf16.msra.mxu0 0
        %1069 = vmatprep.subr.bf16.mxu0 0
        %1070 = vmatpush1.bf16.msra.mxu0 0
        %1071 = vmatprep.subr.bf16.mxu0 0
        %1072 = vmatpush1.bf16.msra.mxu0 0
        %1073 = vmatprep.subr.bf16.mxu0 0
        %1074 = vmatpush1.bf16.msra.mxu0 0
        %1075 = vmatprep.subr.bf16.mxu0 0
        %1076 = vmatpush1.bf16.msra.mxu0 0
        %1077 = vmatprep.subr.bf16.mxu0 0
        %1078 = vmatpush1.bf16.msra.mxu0 0
        %1079 = vmatprep.subr.bf16.mxu0 0
        %1080 = vmatpush1.bf16.msra.mxu0 0
        %1081 = vmatprep.subr.bf16.mxu0 0
        %1082 = vmatpush1.bf16.msra.mxu0 0
        %1083 = vmatprep.mubr.bf16.mxu0 0
        %1084 = vmatmul.mubr.bf16.gmra.mrb[0].mxu0 %v1049
        %v1085 = vpop.f32.mrb[0].mxu0
        %v1086 = vadd.f32 %v1036, %v1085
        %v1087 = vpop.f32.mrb[0].mxu0
        %v1088 = vadd.f32 %v1036, %v1087
        %v1089 = vpop.f32.mrb[0].mxu0
        %v1090 = vadd.f32 %v1041, %v1089
        %v1091 = vpop.f32.mrb[0].mxu0
        %v1092 = vadd.f32 %v1041, %v1091
        %1093 = vdwg.mxu0
        %v1094 = vtanh.pop %v1086
        %v1095 = vtanh.pop %v1088
        %v1096 = vtanh.pop %v1090
        %v1097 = vtanh.pop %v1092
        %v1098 = vpack.c.bf16 %v1096, %v1094
        %v1099 = vpack.c.bf16 %v1097, %v1095
        %v1100 = vld [vmem:[%s1 + $0x130] sm:$0xf]
        %v1101 = vld [vmem:[%s1 + $0x138] sm:$0xf]
        %v1102 = vunpack.c.l.bf16 %v1101
        %1104 = vset.pattern.permute.xlu0 0
        %1105 = vperm.xlu0 %1104, %v1102
        %v1106 = vpop.permute.xlu0 %1105
        %v1109 = vsel %vm364, %v1100, 0
        %1111 = vmatprep.subr.bf16.mxu0 %v1099
        %1112 = vmatpush1.bf16.msra.mxu0 %v1098
        %1113 = vmatprep.subr.bf16.mxu0 0
        %1114 = vmatpush1.bf16.msra.mxu0 0
        %1115 = vmatprep.subr.bf16.mxu0 0
        %1116 = vmatpush1.bf16.msra.mxu0 0
        %1117 = vmatprep.subr.bf16.mxu0 0
        %1118 = vmatpush1.bf16.msra.mxu0 0
        %1119 = vmatprep.subr.bf16.mxu0 0
        %1120 = vmatpush1.bf16.msra.mxu0 0
        %1121 = vmatprep.subr.bf16.mxu0 0
        %1122 = vmatpush1.bf16.msra.mxu0 0
        %1123 = vmatprep.subr.bf16.mxu0 0
        %1124 = vmatpush1.bf16.msra.mxu0 0
        %1125 = vmatprep.subr.bf16.mxu0 0
        %1126 = vmatpush1.bf16.msra.mxu0 0
        %1127 = vmatprep.subr.bf16.mxu0 0
        %1128 = vmatpush1.bf16.msra.mxu0 0
        %1129 = vmatprep.subr.bf16.mxu0 0
        %1130 = vmatpush1.bf16.msra.mxu0 0
        %1131 = vmatprep.subr.bf16.mxu0 0
        %1132 = vmatpush1.bf16.msra.mxu0 0
        %1133 = vmatprep.subr.bf16.mxu0 0
        %1134 = vmatpush1.bf16.msra.mxu0 0
        %1135 = vmatprep.subr.bf16.mxu0 0
        %1136 = vmatpush1.bf16.msra.mxu0 0
        %1137 = vmatprep.subr.bf16.mxu0 0
        %1138 = vmatpush1.bf16.msra.mxu0 0
        %1139 = vmatprep.subr.bf16.mxu0 0
        %1140 = vmatpush1.bf16.msra.mxu0 0
        %1141 = vmatprep.subr.bf16.mxu0 0
        %1142 = vmatpush1.bf16.msra.mxu0 0
        %1143 = vmatprep.mubr.bf16.mxu0 0
        %1144 = vmatmul.mubr.bf16.gmra.mrb[0].mxu0 %v1109
        %v1145 = vpop.f32.mrb[0].mxu0
        %v1146 = vadd.f32 %v1106, %v1145
        %v1147 = vpop.f32.mrb[0].mxu0
        %v1148 = vadd.f32 %v1106, %v1147
        %v1149 = vpop.f32.mrb[0].mxu0
        %v1150 = vpop.f32.mrb[0].mxu0
        %1151 = vdwg.mxu0
        %v1152 = vmul.f32 %v1146, 0.5
        %v1153 = vmul.f32 %v1148, 0.5
        %v1154 = vtanh.pop %v1152
        %v1155 = vtanh.pop %v1153
        %v1156 = vadd.f32 %v1154, 1.0
        %v1157 = vadd.f32 %v1155, 1.0
        %v1158 = vmul.f32 %v1156, 0.5
        %v1159 = vmul.f32 %v1157, 0.5
        %v1162 = vcombine.low %v1158, %v1159
        %v1164 = vunpack.c.l.s4 1966171168
        %v1165 = vunpack.c.0.s8 %v1164
        %v1166 = vlaneseq
        %v1167 = vshrl.u32 %v1166, 7
        %v1168 = vsub.s32 %v1165, %v1167
        %v1169 = vrot.slane %v1162, %v1168
        %v1171 = vunpack.c.l.s4 1966171168
        %v1172 = vunpack.c.0.s8 %v1171
        %v1173 = vlaneseq
        %v1174 = vshrl.u32 %v1173, 7
        %v1175 = vsub.s32 %v1172, %v1174
        %v1176 = vrot.slane %v1169, %v1175
        %v1178 = vlaneseq
        %vm1179 = vcmp.ge.s32.totalorder %v1178, 0
        %vm1180 = vcmp.lt.s32.totalorder %v1178, 256
        %vm1181 = vmand %vm1179, %vm1180
        %1182 = vst.msk [vmem:[%s181] sm:$0x3] %vm1181, %v1176
        %s1183 = smul.u32 2, %s13
        %p1184 = scmp.lt.s32.totalorder %s1183, 3
        %s1185 = scalar_select %p1184, %s1183, 3
        %s1186 = scalar_lea.vmem %s2, %s1185
        // Predicated region
        $region67: #{net_pisa_run2_combination_forward.1} parent=61 // pred_check
          %p1187 = pneg %p78
        $region68: #{net_pisa_run2_combination_forward.1} parent=61 // pred_check_branch
          %1189 = sbr.rel (%p1187) target = $region70
        $region69: #{net_pisa_run2_combination_forward.1} parent=61 // pred_region
          %s1190 = smul.u32 2, %s13
        $region70: #{net_pisa_run2_combination_forward.1} parent=61 // pred_fallthru
          _
      $region62: #{net_pisa_run2_combination_forward.1} parent=5 // pred_fallthru
        _
      %p1191 = scmp.le.s32.totalorder 2, %s8
      // Predicated region
      $region71: #{net_pisa_run2_combination_forward.1} parent=5 // pred_check
        %p1192 = pneg %p1191
      $region72: #{net_pisa_run2_combination_forward.1} parent=5 // pred_check_branch
        %1194 = sbr.rel (%p1192) target = $region74
      $region73: #{net_pisa_run2_combination_forward.1} parent=5 // pred_region
        %s1195 = ssub.s32 %s8, 2
        // Predicated region
        $region75: #{net_pisa_run2_combination_forward.1} parent=73 // pred_check
          %p1196 = pneg %p84
        $region76: #{net_pisa_run2_combination_forward.1} parent=73 // pred_check_branch
          %1198 = sbr.rel (%p1196) target = $region78
        $region77: #{net_pisa_run2_combination_forward.1} parent=73 // pred_region
          %s1199 = smul.u32 2, %s14
          %p1200 = scmp.lt.s32.totalorder %s1199, 3
          %s1201 = scalar_select %p1200, %s1199, 3
          %s1202 = scalar_lea.vmem %s2, %s1201
        $region78: #{net_pisa_run2_combination_forward.1} parent=73 // pred_fallthru
          _
      $region74: #{net_pisa_run2_combination_forward.1} parent=5 // pred_fallthru
        _
    $region6: #{net_pisa_run2_combination_forward.1} parent=1 // loop_footer
      %s12 = sadd.s32 1, %s8
    $region7: #{net_pisa_run2_combination_forward.1} parent=1 // loop_footer_branch
      %7 = sbr.rel target = $region3
    $region8: #{net_pisa_run2_combination_forward.1} parent=1 // loop_exit
      _

</llo_original>
